<compile_context>
chip_gen: v5e
topology: v5e:2x2
jax: 0.10.0
libtpu: 0.0.40
codegen_flags: <defaults>
</compile_context>

<pallas_src>
import jax
import jax.numpy as jnp
from jax import lax
from jax.experimental import pallas as pl
from jax.experimental.pallas import tpu as pltpu

# ---------------------------------------------------------------------------
# Model hyper-parameters (small synthetic sizes consistent with the pipeline)
# ---------------------------------------------------------------------------
B = 2            # batch
T = 512          # waveform samples
FRAME = 64       # samples per frame
F = T // FRAME   # frames per utterance (= 8)
N = B * F        # total frames in the single program (= 16)
D_MEL = 32       # "fbank" feature dim (logical)
H = 32           # TDNN hidden dim (logical)
E = 32           # embedding dim (logical)
C = 8            # number of classes (logical)
EPS = 1e-5

LANE = 128       # padded lane width for all activations / weight slabs
BP = 8           # sublane-padded output rows (one full (8,128) store)

# Row layout of the single packed bf16 parameter buffer (offsets 16-aligned).
R_WFB = 0                      # [FRAME, LANE]
R_W1 = R_WFB + FRAME           # [3*LANE, LANE]  fused context-3 weight (prev|ctr|next)
R_W2 = R_W1 + 3 * LANE         # [3*LANE, LANE]
R_WEMB = R_W2 + 3 * LANE       # [2*LANE, LANE]  fused [mean|std] weight
R_WCLS = R_WEMB + 2 * LANE     # [LANE, LANE]    (only first E rows / C cols real)
R_BIAS = R_WCLS + LANE         # [16, LANE]      rows: b_fb, b1, b2, b_emb, b_cls
PACK_ROWS = R_BIAS + 16        # = 1232

_HP = lax.Precision.HIGHEST    # reference accumulation precision


# ---------------------------------------------------------------------------
# Pallas kernel: full encoder-classifier forward for the whole batch
# ---------------------------------------------------------------------------
def _audify_kernel(nvalid_ref,      # SMEM scalar prefetch: [B] int32 valid-frame counts
                   frames_ref,      # VMEM [N, FRAME] f32  all utterances, frames flattened
                   wpk_ref,         # VMEM [PACK_ROWS, LANE] bf16 packed weights + biases
                   out_ref):        # VMEM [BP, LANE] f32   padded log-posteriors
    f32 = jnp.float32
    bf16 = jnp.bfloat16

    def dotf(a, w):                 # bf16 operands -> single MXU pass, f32 accumulate
        return jnp.dot(a.astype(bf16), w, preferred_element_type=f32)

    # ---- static, zero-cost bf16 views into the single packed buffer --------
    w_fb = wpk_ref[R_WFB:R_WFB + FRAME, :]           # [64, 128]
    w1 = wpk_ref[R_W1:R_W1 + 3 * LANE, :]            # [384, 128]
    w2 = wpk_ref[R_W2:R_W2 + 3 * LANE, :]            # [384, 128]
    w_emb = wpk_ref[R_WEMB:R_WEMB + 2 * LANE, :]     # [256, 128]
    w_cls = wpk_ref[R_WCLS:R_WCLS + LANE, :]         # [128, 128]
    biases = wpk_ref[R_BIAS:R_BIAS + 16, :].astype(f32)
    b_fb = biases[0:1, :]
    b1 = biases[1:2, :]
    b2 = biases[2:3, :]
    b_emb = biases[3:4, :]
    b_cls = biases[4:5, :]

    # ---- per-utterance valid-frame mask & 1/n from SMEM scalars ------------
    bidx = lax.broadcasted_iota(jnp.int32, (B, F, 1), 0)
    fidx = lax.broadcasted_iota(jnp.int32, (B, F, 1), 1)
    bidx1 = lax.broadcasted_iota(jnp.int32, (B, 1, 1), 0)
    mask = jnp.zeros((B, F, 1), f32)
    inv_n = jnp.zeros((B, 1, 1), f32)
    for b in range(B):                      # B tiny & static -> unrolled at trace time
        nv = nvalid_ref[b]
        mask = jnp.where((bidx == b) & (fidx < nv), 1.0, mask)
        inv_n = jnp.where(bidx1 == b, 1.0 / nv.astype(f32), inv_n)

    def masked_mean(t):                     # (B, F, LANE) -> (B, 1, LANE), XLU/VPU only
        return jnp.sum(t * mask, axis=1, keepdims=True) * inv_n

    # ---- "Fbank" feature projection -----------------------------------------
    feats = dotf(frames_ref[...], w_fb) + b_fb                   # [N, 128]
    x = feats.reshape(B, F, LANE)                                # tile-aligned (free)

    # ---- per-sentence masked mean/var normalization -------------------------
    mean = masked_mean(x)
    d = x - mean
    var = masked_mean(d * d)
    x = d * lax.rsqrt(var + EPS) * mask                          # [B, F, 128]

    # ---- two context-3 TDNN layers: sublane shifts + ONE fused K=384 matmul --
    zrow = jnp.zeros((B, 1, LANE), f32)

    def tdnn(t, w_fused, bias):
        tp = jnp.concatenate([zrow, t[:, :F - 1, :]], axis=1)    # frame f-1 (0 at edge)
        tn = jnp.concatenate([t[:, 1:, :], zrow], axis=1)        # frame f+1 (0 at edge)
        ctx = jnp.concatenate([tp.reshape(N, LANE), t.reshape(N, LANE),
                               tn.reshape(N, LANE)], axis=1)     # [N, 384], 128-aligned
        y = dotf(ctx, w_fused) + bias                            # [N, 128]
        return jnp.maximum(y, 0.0).reshape(B, F, LANE)

    h = tdnn(tdnn(x, w1, b1), w2, b2)                            # [B, F, 128]

    # ---- masked statistics pooling (mean + std over valid frames) ----------
    mean_h = masked_mean(h)                                      # [B, 1, 128]
    dh = (h - mean_h) * mask
    std_h = jnp.sqrt(masked_mean(dh * dh) + EPS)                 # [B, 1, 128]
    pooled = jnp.concatenate([mean_h, std_h], axis=2).reshape(B, 2 * LANE)   # [B, 256]

    # ---- embedding (fused [mean|std]) + classifier + masked log-softmax -----
    emb = dotf(pooled, w_emb) + b_emb                            # [B, 128]
    logits = dotf(emb, w_cls) + b_cls                            # [B, 128]
    lane = lax.broadcasted_iota(jnp.int32, (B, LANE), 1)
    logits = jnp.where(lane < C, logits, -1e30)                  # mask padded classes
    z = logits - jnp.max(logits, axis=1, keepdims=True)
    lsm = z - jnp.log(jnp.sum(jnp.exp(z), axis=1, keepdims=True))

    # one unmasked (8, 128) store; wrapper slices [:B, :C]
    out_ref[...] = jnp.concatenate([lsm, jnp.zeros((BP - B, LANE), f32)], axis=0)


# ---------------------------------------------------------------------------
# One-time parameter packing (hoisted out of the per-call jitted path)
# ---------------------------------------------------------------------------
def pack_params(p):
    """Pad weights to 128 lanes, fuse TDNN / embedding K-blocks, pack into ONE
    contiguous bf16 [PACK_ROWS, 128] buffer (single DMA)."""
    def padw(w, rows):
        out = jnp.zeros((rows, LANE), jnp.float32)
        return out.at[:w.shape[0], :w.shape[1]].set(w)

    bias_blk = jnp.zeros((16, LANE), jnp.float32)
    bias_blk = bias_blk.at[0, :D_MEL].set(p["b_fb"][0])
    bias_blk = bias_blk.at[1, :H].set(p["b1"][0])
    bias_blk = bias_blk.at[2, :H].set(p["b2"][0])
    bias_blk = bias_blk.at[3, :E].set(p["b_emb"][0])
    bias_blk = bias_blk.at[4, :C].set(p["b_cls"][0])

    packed = jnp.concatenate([
        padw(p["w_fb"], FRAME),
        padw(p["w1"][0], LANE), padw(p["w1"][1], LANE), padw(p["w1"][2], LANE),
        padw(p["w2"][0], LANE), padw(p["w2"][1], LANE), padw(p["w2"][2], LANE),
        padw(p["w_emb"][0], LANE), padw(p["w_emb"][1], LANE),
        padw(p["w_cls"], LANE),
        bias_blk,
    ], axis=0)
    assert packed.shape == (PACK_ROWS, LANE)
    return packed.astype(jnp.bfloat16)


# ---------------------------------------------------------------------------
# Forward wrapper
# ---------------------------------------------------------------------------
@jax.jit
def audify_forward(wavs, wav_lens, packed):
    """wavs: [B, T] f32, wav_lens: [B] relative lengths in (0, 1],
    packed: pack_params(...) -> [B, C] log-posteriors."""
    frames = wavs.astype(jnp.float32).reshape(N, FRAME)
    # relative length -> valid frame count (round-half-to-even, like torch.round)
    n_valid = jnp.maximum(jnp.round(wav_lens.astype(jnp.float32) * F),
                          1.0).astype(jnp.int32)

    grid_spec = pltpu.PrefetchScalarGridSpec(
        num_scalar_prefetch=1,
        grid=(1,),                      # whole batch in ONE program
        in_specs=[
            pl.BlockSpec((N, FRAME), lambda i, nv: (0, 0)),           # frames
            pl.BlockSpec((PACK_ROWS, LANE), lambda i, nv: (0, 0)),    # packed params
        ],
        out_specs=pl.BlockSpec((BP, LANE), lambda i, nv: (0, 0)),     # padded output
    )
    out = pl.pallas_call(
        _audify_kernel,
        out_shape=jax.ShapeDtypeStruct((BP, LANE), jnp.float32),
        grid_spec=grid_spec,
        compiler_params=pltpu.CompilerParams(
            dimension_semantics=("arbitrary",)),
    )(n_valid, frames, packed)
    return out[:B, :C]


# ---------------------------------------------------------------------------
# Pure-JAX reference (same math; mirrors bf16 matmul-operand rounding)
# ---------------------------------------------------------------------------
def audify_reference(wavs, wav_lens, p):
    rb = lambda a: a.astype(jnp.bfloat16).astype(jnp.float32)
    bdot = lambda a, b: jnp.dot(rb(a), rb(b), precision=_HP)

    frames = wavs.astype(jnp.float32).reshape(B, F, FRAME)
    n_valid = jnp.maximum(jnp.round(wav_lens.astype(jnp.float32) * F),
                          1.0).astype(jnp.int32)

    def one(fr, nvi):
        inv_n = 1.0 / nvi.astype(jnp.float32)
        idx = jnp.arange(F)[:, None]
        mask = (idx < nvi).astype(jnp.float32)

        feats = bdot(fr, p["w_fb"]) + p["b_fb"]
        mean = jnp.sum(feats * mask, 0, keepdims=True) * inv_n
        var = jnp.sum(((feats - mean) ** 2) * mask, 0, keepdims=True) * inv_n
        feats = (feats - mean) * lax.rsqrt(var + EPS) * mask

        def tdnn(x, w, b):
            xm1 = jnp.where(idx >= 1, jnp.roll(x, 1, axis=0), 0.0)
            xp1 = jnp.where(idx < (F - 1), jnp.roll(x, -1, axis=0), 0.0)
            return jnp.maximum(
                bdot(xm1, w[0]) + bdot(x, w[1]) + bdot(xp1, w[2]) + b, 0.0)

        h2 = tdnn(tdnn(feats, p["w1"], p["b1"]), p["w2"], p["b2"])
        mean_h = jnp.sum(h2 * mask, 0, keepdims=True) * inv_n
        var_h = jnp.sum(((h2 - mean_h) ** 2) * mask, 0, keepdims=True) * inv_n
        std_h = jnp.sqrt(var_h + EPS)
        emb = bdot(mean_h, p["w_emb"][0]) + bdot(std_h, p["w_emb"][1]) + p["b_emb"]
        logits = bdot(emb, p["w_cls"]) + p["b_cls"]
        return jax.nn.log_softmax(logits, axis=-1)[0]

    return jax.vmap(one)(frames, n_valid)


# ---------------------------------------------------------------------------
# Deterministic parameter init
# ---------------------------------------------------------------------------
def init_params(key):
    ks = jax.random.split(key, 6)
    scale = lambda fan_in: 1.0 / jnp.sqrt(jnp.float32(fan_in))
    return {
        "w_fb": jax.random.normal(ks[0], (FRAME, D_MEL), jnp.float32) * scale(FRAME),
        "b_fb": jnp.zeros((1, D_MEL), jnp.float32),
        "w1": jax.random.normal(ks[1], (3, D_MEL, H), jnp.float32) * scale(3 * D_MEL),
        "b1": jnp.full((1, H), 0.01, jnp.float32),
        "w2": jax.random.normal(ks[2], (3, H, H), jnp.float32) * scale(3 * H),
        "b2": jnp.full((1, H), 0.01, jnp.float32),
        "w_emb": jax.random.normal(ks[3], (2, H, E), jnp.float32) * scale(2 * H),
        "b_emb": jnp.zeros((1, E), jnp.float32),
        "w_cls": jax.random.normal(ks[4], (E, C), jnp.float32) * scale(E),
        "b_cls": jnp.zeros((1, C), jnp.float32),
    }


if __name__ == "__main__":
    key = jax.random.PRNGKey(0)
    k_wav, k_param = jax.random.split(key)

    wavs = jax.random.normal(k_wav, (B, T), jnp.float32) * 0.1
    wav_lens = jnp.array([1.0, 0.625], jnp.float32)   # relative lengths
    params = init_params(k_param)
    packed = pack_params(params)                       # packed ONCE, outside the hot path

    out = audify_forward(wavs, wav_lens, packed)
    out = jax.block_until_ready(out)

    ref = audify_reference(wavs, wav_lens, params)
    assert out.shape == (B, C)
    # both kernel and reference use bf16 matmul operands with f32 accumulation;
    # remaining differences are f32 accumulation-order / transcendental ulps.
    assert jnp.allclose(out, ref, atol=5e-3, rtol=5e-3), (out, ref)
    # log-softmax rows should sum (in prob space) to ~1
    assert jnp.allclose(jnp.exp(out).sum(-1), 1.0, atol=1e-4)

    print("KERNEL_OK")
</pallas_src>

<mosaic_0001>
module attributes {stable_mosaic.version = 11 : i64} {
  func.func @_audify_kernel(%arg0: i32, %arg1: memref<2xi32, #tpu.memory_space<smem>>, %arg2: memref<16x64xf32, #tpu.memory_space<vmem>>, %arg3: memref<1232x128xbf16, #tpu.memory_space<vmem>>, %arg4: memref<8x128xf32, #tpu.memory_space<vmem>>) attributes {dimension_semantics = [#tpu.dimension_semantics<arbitrary>], iteration_bounds = array<i64: 1>, scalar_prefetch = 1 : i64, scratch_operands = 0 : i64, tpu.core_type = #tpu.core_type<tc>, window_params = [{pipeline_mode = #tpu.pipeline_mode<synchronous>, transform_indices = @transform_0, window_bounds = array<i64: 16, 64>}, {pipeline_mode = #tpu.pipeline_mode<synchronous>, transform_indices = @transform_1, window_bounds = array<i64: 1232, 128>}, {pipeline_mode = #tpu.pipeline_mode<synchronous>, transform_indices = @transform_2, window_bounds = array<i64: 8, 128>}]} {
    %c0 = arith.constant 0 : index
    %c0_0 = arith.constant 0 : index
    %0 = vector.load %arg3[%c0, %c0_0] : memref<1232x128xbf16, #tpu.memory_space<vmem>>, vector<64x128xbf16>
    %c64 = arith.constant 64 : index
    %c0_1 = arith.constant 0 : index
    %1 = vector.load %arg3[%c64, %c0_1] : memref<1232x128xbf16, #tpu.memory_space<vmem>>, vector<384x128xbf16>
    %c448 = arith.constant 448 : index
    %c0_2 = arith.constant 0 : index
    %2 = vector.load %arg3[%c448, %c0_2] : memref<1232x128xbf16, #tpu.memory_space<vmem>>, vector<384x128xbf16>
    %c832 = arith.constant 832 : index
    %c0_3 = arith.constant 0 : index
    %3 = vector.load %arg3[%c832, %c0_3] : memref<1232x128xbf16, #tpu.memory_space<vmem>>, vector<256x128xbf16>
    %c1088 = arith.constant 1088 : index
    %c0_4 = arith.constant 0 : index
    %4 = vector.load %arg3[%c1088, %c0_4] : memref<1232x128xbf16, #tpu.memory_space<vmem>>, vector<128x128xbf16>
    %c1216 = arith.constant 1216 : index
    %c0_5 = arith.constant 0 : index
    %5 = vector.load %arg3[%c1216, %c0_5] : memref<1232x128xbf16, #tpu.memory_space<vmem>>, vector<16x128xbf16>
    %6 = arith.extf %5 : vector<16x128xbf16> to vector<16x128xf32>
    %7 = vector.extract_strided_slice %6 {offsets = [0, 0], sizes = [1, 128], strides = [1, 1]} : vector<16x128xf32> to vector<1x128xf32>
    %8 = vector.extract_strided_slice %6 {offsets = [1, 0], sizes = [1, 128], strides = [1, 1]} : vector<16x128xf32> to vector<1x128xf32>
    %9 = vector.extract_strided_slice %6 {offsets = [2, 0], sizes = [1, 128], strides = [1, 1]} : vector<16x128xf32> to vector<1x128xf32>
    %10 = vector.extract_strided_slice %6 {offsets = [3, 0], sizes = [1, 128], strides = [1, 1]} : vector<16x128xf32> to vector<1x128xf32>
    %11 = vector.extract_strided_slice %6 {offsets = [4, 0], sizes = [1, 128], strides = [1, 1]} : vector<16x128xf32> to vector<1x128xf32>
    %12 = tpu.iota {dimensions = array<i32: 0>} : vector<2x8x1xi32>
    %13 = tpu.iota {dimensions = array<i32: 1>} : vector<2x8x1xi32>
    %14 = tpu.iota {dimensions = array<i32: 0>} : vector<2x1x1xi32>
    %cst = arith.constant 0.000000e+00 : f32
    %15 = vector.broadcast %cst : f32 to vector<2x8x1xf32>
    %cst_6 = arith.constant 0.000000e+00 : f32
    %16 = vector.broadcast %cst_6 : f32 to vector<2x1x1xf32>
    %c0_7 = arith.constant 0 : index
    %17 = memref.load %arg1[%c0_7] : memref<2xi32, #tpu.memory_space<smem>>
    %c0_i32 = arith.constant 0 : i32
    %18 = vector.broadcast %c0_i32 : i32 to vector<2x8x1xi32>
    %19 = arith.cmpi eq, %12, %18 : vector<2x8x1xi32>
    %20 = vector.broadcast %17 : i32 to vector<2x8x1xi32>
    %21 = arith.cmpi slt, %13, %20 : vector<2x8x1xi32>
    %22 = arith.andi %19, %21 : vector<2x8x1xi1>
    %cst_8 = arith.constant 1.000000e+00 : f32
    %23 = vector.broadcast %cst_8 : f32 to vector<2x8x1xf32>
    %24 = arith.select %22, %23, %15 : vector<2x8x1xi1>, vector<2x8x1xf32>
    %c0_i32_9 = arith.constant 0 : i32
    %25 = vector.broadcast %c0_i32_9 : i32 to vector<2x1x1xi32>
    %26 = arith.cmpi eq, %14, %25 : vector<2x1x1xi32>
    %27 = arith.sitofp %17 : i32 to f32
    %cst_10 = arith.constant 1.000000e+00 : f32
    %28 = arith.divf %cst_10, %27 : f32
    %29 = vector.broadcast %28 : f32 to vector<2x1x1xf32>
    %30 = arith.select %26, %29, %16 : vector<2x1x1xi1>, vector<2x1x1xf32>
    %c1 = arith.constant 1 : index
    %31 = memref.load %arg1[%c1] : memref<2xi32, #tpu.memory_space<smem>>
    %c1_i32 = arith.constant 1 : i32
    %32 = vector.broadcast %c1_i32 : i32 to vector<2x8x1xi32>
    %33 = arith.cmpi eq, %12, %32 : vector<2x8x1xi32>
    %34 = vector.broadcast %31 : i32 to vector<2x8x1xi32>
    %35 = arith.cmpi slt, %13, %34 : vector<2x8x1xi32>
    %36 = arith.andi %33, %35 : vector<2x8x1xi1>
    %cst_11 = arith.constant 1.000000e+00 : f32
    %37 = vector.broadcast %cst_11 : f32 to vector<2x8x1xf32>
    %38 = arith.select %36, %37, %24 : vector<2x8x1xi1>, vector<2x8x1xf32>
    %c1_i32_12 = arith.constant 1 : i32
    %39 = vector.broadcast %c1_i32_12 : i32 to vector<2x1x1xi32>
    %40 = arith.cmpi eq, %14, %39 : vector<2x1x1xi32>
    %41 = arith.sitofp %31 : i32 to f32
    %cst_13 = arith.constant 1.000000e+00 : f32
    %42 = arith.divf %cst_13, %41 : f32
    %43 = vector.broadcast %42 : f32 to vector<2x1x1xf32>
    %44 = arith.select %40, %43, %30 : vector<2x1x1xi1>, vector<2x1x1xf32>
    %c0_14 = arith.constant 0 : index
    %c0_15 = arith.constant 0 : index
    %45 = vector.load %arg2[%c0_14, %c0_15] : memref<16x64xf32, #tpu.memory_space<vmem>>, vector<16x64xf32>
    %46 = arith.truncf %45 : vector<16x64xf32> to vector<16x64xbf16>
    %cst_16 = arith.constant dense<0.000000e+00> : vector<16x128xf32>
    %47 = tpu.matmul %46, %0, %cst_16 {dimension_numbers = #tpu.dot_dimension_numbers<[1], [0], [0], [1], [0, 0, 1, 1], [], []>} : vector<16x64xbf16>, vector<64x128xbf16>, vector<16x128xf32> -> vector<16x128xf32>
    %48 = vector.broadcast %7 : vector<1x128xf32> to vector<16x128xf32>
    %49 = arith.addf %47, %48 : vector<16x128xf32>
    %50 = vector.shape_cast %49 : vector<16x128xf32> to vector<2x8x128xf32>
    %51 = vector.broadcast %38 : vector<2x8x1xf32> to vector<2x8x128xf32>
    %52 = arith.mulf %50, %51 : vector<2x8x128xf32>
    %cst_17 = arith.constant dense<0.000000e+00> : vector<2x128xf32>
    %53 = vector.multi_reduction <add>, %52, %cst_17 [1] : vector<2x8x128xf32> to vector<2x128xf32>
    %54 = vector.shape_cast %53 : vector<2x128xf32> to vector<2x1x128xf32>
    %55 = vector.broadcast %44 : vector<2x1x1xf32> to vector<2x1x128xf32>
    %56 = arith.mulf %54, %55 : vector<2x1x128xf32>
    %57 = vector.broadcast %56 : vector<2x1x128xf32> to vector<2x8x128xf32>
    %58 = arith.subf %50, %57 : vector<2x8x128xf32>
    %59 = arith.mulf %58, %58 : vector<2x8x128xf32>
    %60 = vector.broadcast %38 : vector<2x8x1xf32> to vector<2x8x128xf32>
    %61 = arith.mulf %59, %60 : vector<2x8x128xf32>
    %cst_18 = arith.constant dense<0.000000e+00> : vector<2x128xf32>
    %62 = vector.multi_reduction <add>, %61, %cst_18 [1] : vector<2x8x128xf32> to vector<2x128xf32>
    %63 = vector.shape_cast %62 : vector<2x128xf32> to vector<2x1x128xf32>
    %64 = vector.broadcast %44 : vector<2x1x1xf32> to vector<2x1x128xf32>
    %65 = arith.mulf %63, %64 : vector<2x1x128xf32>
    %cst_19 = arith.constant 9.99999974E-6 : f32
    %66 = vector.broadcast %cst_19 : f32 to vector<2x1x128xf32>
    %67 = arith.addf %65, %66 : vector<2x1x128xf32>
    %68 = math.rsqrt %67 : vector<2x1x128xf32>
    %69 = vector.broadcast %68 : vector<2x1x128xf32> to vector<2x8x128xf32>
    %70 = arith.mulf %58, %69 : vector<2x8x128xf32>
    %71 = vector.broadcast %38 : vector<2x8x1xf32> to vector<2x8x128xf32>
    %72 = arith.mulf %70, %71 : vector<2x8x128xf32>
    %cst_20 = arith.constant 0.000000e+00 : f32
    %73 = vector.broadcast %cst_20 : f32 to vector<2x1x128xf32>
    %74 = vector.extract_strided_slice %72 {offsets = [0, 0, 0], sizes = [2, 7, 128], strides = [1, 1, 1]} : vector<2x8x128xf32> to vector<2x7x128xf32>
    %75 = tpu.concatenate %73, %74 in 1 : vector<2x1x128xf32>, vector<2x7x128xf32> -> vector<2x8x128xf32>
    %76 = vector.extract_strided_slice %72 {offsets = [0, 1, 0], sizes = [2, 7, 128], strides = [1, 1, 1]} : vector<2x8x128xf32> to vector<2x7x128xf32>
    %77 = tpu.concatenate %76, %73 in 1 : vector<2x7x128xf32>, vector<2x1x128xf32> -> vector<2x8x128xf32>
    %78 = vector.shape_cast %75 : vector<2x8x128xf32> to vector<16x128xf32>
    %79 = vector.shape_cast %72 : vector<2x8x128xf32> to vector<16x128xf32>
    %80 = vector.shape_cast %77 : vector<2x8x128xf32> to vector<16x128xf32>
    %81 = tpu.concatenate %78, %79, %80 in 1 : vector<16x128xf32>, vector<16x128xf32>, vector<16x128xf32> -> vector<16x384xf32>
    %82 = arith.truncf %81 : vector<16x384xf32> to vector<16x384xbf16>
    %cst_21 = arith.constant dense<0.000000e+00> : vector<16x128xf32>
    %83 = tpu.matmul %82, %1, %cst_21 {dimension_numbers = #tpu.dot_dimension_numbers<[1], [0], [0], [1], [0, 0, 1, 1], [], []>} : vector<16x384xbf16>, vector<384x128xbf16>, vector<16x128xf32> -> vector<16x128xf32>
    %84 = vector.broadcast %8 : vector<1x128xf32> to vector<16x128xf32>
    %85 = arith.addf %83, %84 : vector<16x128xf32>
    %cst_22 = arith.constant 0.000000e+00 : f32
    %86 = vector.broadcast %cst_22 : f32 to vector<16x128xf32>
    %87 = arith.maximumf %85, %86 : vector<16x128xf32>
    %88 = vector.shape_cast %87 : vector<16x128xf32> to vector<2x8x128xf32>
    %89 = vector.extract_strided_slice %88 {offsets = [0, 0, 0], sizes = [2, 7, 128], strides = [1, 1, 1]} : vector<2x8x128xf32> to vector<2x7x128xf32>
    %90 = tpu.concatenate %73, %89 in 1 : vector<2x1x128xf32>, vector<2x7x128xf32> -> vector<2x8x128xf32>
    %91 = vector.extract_strided_slice %88 {offsets = [0, 1, 0], sizes = [2, 7, 128], strides = [1, 1, 1]} : vector<2x8x128xf32> to vector<2x7x128xf32>
    %92 = tpu.concatenate %91, %73 in 1 : vector<2x7x128xf32>, vector<2x1x128xf32> -> vector<2x8x128xf32>
    %93 = vector.shape_cast %90 : vector<2x8x128xf32> to vector<16x128xf32>
    %94 = vector.shape_cast %88 : vector<2x8x128xf32> to vector<16x128xf32>
    %95 = vector.shape_cast %92 : vector<2x8x128xf32> to vector<16x128xf32>
    %96 = tpu.concatenate %93, %94, %95 in 1 : vector<16x128xf32>, vector<16x128xf32>, vector<16x128xf32> -> vector<16x384xf32>
    %97 = arith.truncf %96 : vector<16x384xf32> to vector<16x384xbf16>
    %cst_23 = arith.constant dense<0.000000e+00> : vector<16x128xf32>
    %98 = tpu.matmul %97, %2, %cst_23 {dimension_numbers = #tpu.dot_dimension_numbers<[1], [0], [0], [1], [0, 0, 1, 1], [], []>} : vector<16x384xbf16>, vector<384x128xbf16>, vector<16x128xf32> -> vector<16x128xf32>
    %99 = vector.broadcast %9 : vector<1x128xf32> to vector<16x128xf32>
    %100 = arith.addf %98, %99 : vector<16x128xf32>
    %cst_24 = arith.constant 0.000000e+00 : f32
    %101 = vector.broadcast %cst_24 : f32 to vector<16x128xf32>
    %102 = arith.maximumf %100, %101 : vector<16x128xf32>
    %103 = vector.shape_cast %102 : vector<16x128xf32> to vector<2x8x128xf32>
    %104 = vector.broadcast %38 : vector<2x8x1xf32> to vector<2x8x128xf32>
    %105 = arith.mulf %103, %104 : vector<2x8x128xf32>
    %cst_25 = arith.constant dense<0.000000e+00> : vector<2x128xf32>
    %106 = vector.multi_reduction <add>, %105, %cst_25 [1] : vector<2x8x128xf32> to vector<2x128xf32>
    %107 = vector.shape_cast %106 : vector<2x128xf32> to vector<2x1x128xf32>
    %108 = vector.broadcast %44 : vector<2x1x1xf32> to vector<2x1x128xf32>
    %109 = arith.mulf %107, %108 : vector<2x1x128xf32>
    %110 = vector.broadcast %109 : vector<2x1x128xf32> to vector<2x8x128xf32>
    %111 = arith.subf %103, %110 : vector<2x8x128xf32>
    %112 = vector.broadcast %38 : vector<2x8x1xf32> to vector<2x8x128xf32>
    %113 = arith.mulf %111, %112 : vector<2x8x128xf32>
    %114 = arith.mulf %113, %113 : vector<2x8x128xf32>
    %115 = vector.broadcast %38 : vector<2x8x1xf32> to vector<2x8x128xf32>
    %116 = arith.mulf %114, %115 : vector<2x8x128xf32>
    %cst_26 = arith.constant dense<0.000000e+00> : vector<2x128xf32>
    %117 = vector.multi_reduction <add>, %116, %cst_26 [1] : vector<2x8x128xf32> to vector<2x128xf32>
    %118 = vector.shape_cast %117 : vector<2x128xf32> to vector<2x1x128xf32>
    %119 = vector.broadcast %44 : vector<2x1x1xf32> to vector<2x1x128xf32>
    %120 = arith.mulf %118, %119 : vector<2x1x128xf32>
    %cst_27 = arith.constant 9.99999974E-6 : f32
    %121 = vector.broadcast %cst_27 : f32 to vector<2x1x128xf32>
    %122 = arith.addf %120, %121 : vector<2x1x128xf32>
    %123 = math.sqrt %122 : vector<2x1x128xf32>
    %124 = tpu.concatenate %109, %123 in 2 : vector<2x1x128xf32>, vector<2x1x128xf32> -> vector<2x1x256xf32>
    %125 = vector.shape_cast %124 : vector<2x1x256xf32> to vector<2x256xf32>
    %126 = arith.truncf %125 : vector<2x256xf32> to vector<2x256xbf16>
    %cst_28 = arith.constant dense<0.000000e+00> : vector<2x128xf32>
    %127 = tpu.matmul %126, %3, %cst_28 {dimension_numbers = #tpu.dot_dimension_numbers<[1], [0], [0], [1], [0, 0, 1, 1], [], []>} : vector<2x256xbf16>, vector<256x128xbf16>, vector<2x128xf32> -> vector<2x128xf32>
    %128 = vector.broadcast %10 : vector<1x128xf32> to vector<2x128xf32>
    %129 = arith.addf %127, %128 : vector<2x128xf32>
    %130 = arith.truncf %129 : vector<2x128xf32> to vector<2x128xbf16>
    %cst_29 = arith.constant dense<0.000000e+00> : vector<2x128xf32>
    %131 = tpu.matmul %130, %4, %cst_29 {dimension_numbers = #tpu.dot_dimension_numbers<[1], [0], [0], [1], [0, 0, 1, 1], [], []>} : vector<2x128xbf16>, vector<128x128xbf16>, vector<2x128xf32> -> vector<2x128xf32>
    %132 = vector.broadcast %11 : vector<1x128xf32> to vector<2x128xf32>
    %133 = arith.addf %131, %132 : vector<2x128xf32>
    %134 = tpu.iota {dimensions = array<i32: 1>} : vector<2x128xi32>
    %c8_i32 = arith.constant 8 : i32
    %135 = vector.broadcast %c8_i32 : i32 to vector<2x128xi32>
    %136 = arith.cmpi slt, %134, %135 : vector<2x128xi32>
    %cst_30 = arith.constant -1.000000e+30 : f32
    %137 = vector.broadcast %cst_30 : f32 to vector<2x128xf32>
    %138 = arith.select %136, %133, %137 : vector<2x128xi1>, vector<2x128xf32>
    %cst_31 = arith.constant dense<0xFF800000> : vector<2xf32>
    %139 = vector.multi_reduction <maximumf>, %138, %cst_31 [1] : vector<2x128xf32> to vector<2xf32>
    %140 = vector.shape_cast %139 : vector<2xf32> to vector<2x1xf32>
    %141 = vector.broadcast %140 : vector<2x1xf32> to vector<2x128xf32>
    %142 = arith.subf %138, %141 : vector<2x128xf32>
    %143 = math.exp %142 : vector<2x128xf32>
    %cst_32 = arith.constant dense<0.000000e+00> : vector<2xf32>
    %144 = vector.multi_reduction <add>, %143, %cst_32 [1] : vector<2x128xf32> to vector<2xf32>
    %145 = vector.shape_cast %144 : vector<2xf32> to vector<2x1xf32>
    %146 = math.log %145 : vector<2x1xf32>
    %147 = vector.broadcast %146 : vector<2x1xf32> to vector<2x128xf32>
    %148 = arith.subf %142, %147 : vector<2x128xf32>
    %cst_33 = arith.constant 0.000000e+00 : f32
    %149 = vector.broadcast %cst_33 : f32 to vector<6x128xf32>
    %150 = tpu.concatenate %148, %149 in 0 : vector<2x128xf32>, vector<6x128xf32> -> vector<8x128xf32>
    %c0_34 = arith.constant 0 : index
    %c0_35 = arith.constant 0 : index
    %151 = vector.load %arg4[%c0_34, %c0_35] : memref<8x128xf32, #tpu.memory_space<vmem>>, vector<8x128xf32>
    tpu.vector_store %arg4[%c0_34, %c0_35], %150 {strides = array<i32>} : memref<8x128xf32, #tpu.memory_space<vmem>>, vector<8x128xf32>,
    return
  }
  func.func @transform_0(%arg0: i32, %arg1: memref<2xi32, #tpu.memory_space<smem>>) -> (i32, i32) {
    %c0_i32 = arith.constant 0 : i32
    %c0_i32_0 = arith.constant 0 : i32
    %c0_i32_1 = arith.constant 0 : i32
    return %c0_i32, %c0_i32_0 : i32, i32
  }
  func.func @transform_1(%arg0: i32, %arg1: memref<2xi32, #tpu.memory_space<smem>>) -> (i32, i32) {
    %c0_i32 = arith.constant 0 : i32
    %c0_i32_0 = arith.constant 0 : i32
    %c0_i32_1 = arith.constant 0 : i32
    return %c0_i32, %c0_i32_0 : i32, i32
  }
  func.func @transform_2(%arg0: i32, %arg1: memref<2xi32, #tpu.memory_space<smem>>) -> (i32, i32) {
    %c0_i32 = arith.constant 0 : i32
    %c0_i32_0 = arith.constant 0 : i32
    %c0_i32_1 = arith.constant 0 : i32
    return %c0_i32, %c0_i32_0 : i32, i32
  }
}

</mosaic_0001>

<llo_original>
// kernel: audify_forward.1
$region0: #{audify_forward.1}
  #allocation0 [shape = 'u32[]', space=smem, size = 0x4, offset = 0x4, fixed_abs, tag = 'smem constant byte address 0x4 - core index']
  #allocation1 [shape = 'u32[72,128]{1,0:T(1,128)}', space=vmem, size = 0x9000, scoped, tag = 'internal scratch']
  #allocation2 [shape = 's32[1]{0}', space=sflag, size = 0x4, scoped, tag = 'scoped memory for audify_forward.1']
  #allocation3 [shape = 'u8[512]{0}', space=smem, size = 0x200, scoped, tag = 'prefetched SMEM operand 0']
  %s0 = inlined_call_operand.vmem [shape: s32[2], index: 0, kind: input, shape index: {}]
  %s1 = inlined_call_operand.vmem [shape: f32[16,64], index: 1, kind: input, shape index: {}]
  %s2 = inlined_call_operand.hbm [shape: bf16[1232,128], index: 2, kind: input, shape index: {}]
  %s3 = inlined_call_operand.vmem [shape: f32[8,128], index: 3, kind: output, shape index: {}]
  %s4 = sld [smem:[#allocation0]]
  $region22: #{audify_forward.1} parent=0
    _
  %s6 = ssub.s32 1, %s4
  %s7 = scalar_select 0, %s6, %s4
  %s9 = sshll.u32 %s0, 4
  %s10 = int_to_ptr.vmem [resolvable:$true] %s9
  %12 = dma.vmem_to_smem %s10, 16, [#allocation3], [#allocation2]
  %14 = dma.done [#allocation2], 16
  %15 = sfence
  $region1: #{audify_forward.1} parent=0
    #allocation4 [shape = 'u8[315392]{0}', space=vmem, size = 0x4d000, scoped, tag = 'input window, operand 2, single buffered']
    #allocation5 [shape = 's32[1]{0}', space=sflag, size = 0x4, scoped, tag = 'scoped memory for audify_forward.1']
    %16 = vsyncpa [#allocation5], 0
    // Predicated region
    $region2: #{audify_forward.1} parent=1 // pred_check
      _
    $region3: #{audify_forward.1} parent=1 // pred_check_branch
      %18 = sbr.rel (0) target = $region5
    $region4: #{audify_forward.1} parent=1 // pred_region
      _
    $region5: #{audify_forward.1} parent=1 // pred_fallthru
      _
    // Predicated region
    $region6: #{audify_forward.1} parent=1 // pred_check
      _
    $region7: #{audify_forward.1} parent=1 // pred_check_branch
      %20 = sbr.rel (0) target = $region9
    $region8: #{audify_forward.1} parent=1 // pred_region
      %22 = vsyncadd [#allocation5], 0
      %s23 = sshll.u32 %s2, 4
      %s24 = int_to_ptr.hbm [resolvable:$true] %s23
      %s25 = sshll.u32 [#allocation4], 4
      %s26 = int_to_ptr.vmem [resolvable:$true] %s25
      %31 = dma.hbm_to_vmem [thread:$0]  %s24, 9856, %s26, [#allocation5], 64, 64, 4
    $region9: #{audify_forward.1} parent=1 // pred_fallthru
      _
    // Predicated region
    $region10: #{audify_forward.1} parent=1 // pred_check
      _
    $region11: #{audify_forward.1} parent=1 // pred_check_branch
      %33 = sbr.rel (0) target = $region13
    $region12: #{audify_forward.1} parent=1 // pred_region
      %35 = dma.done [#allocation5], 9856
    $region13: #{audify_forward.1} parent=1 // pred_fallthru
      _
    %v37 = vld [vmem:[#allocation4] sm:$0xf]
    %v38 = vld [vmem:[#allocation4 + $0x4] sm:$0xf]
    %v39 = vld [vmem:[#allocation4 + $0x8] sm:$0xf]
    %v40 = vld [vmem:[#allocation4 + $0xc] sm:$0xf]
    %v41 = vld [vmem:[#allocation4 + $0x10] sm:$0xf]
    %v42 = vld [vmem:[#allocation4 + $0x14] sm:$0xf]
    %v43 = vld [vmem:[#allocation4 + $0x18] sm:$0xf]
    %v44 = vld [vmem:[#allocation4 + $0x1c] sm:$0xf]
    %v45 = vld [vmem:[#allocation4 + $0x20] sm:$0xf]
    %v46 = vld [vmem:[#allocation4 + $0x24] sm:$0xf]
    %v47 = vld [vmem:[#allocation4 + $0x28] sm:$0xf]
    %v48 = vld [vmem:[#allocation4 + $0x2c] sm:$0xf]
    %v49 = vld [vmem:[#allocation4 + $0x30] sm:$0xf]
    %v50 = vld [vmem:[#allocation4 + $0x34] sm:$0xf]
    %v51 = vld [vmem:[#allocation4 + $0x38] sm:$0xf]
    %v52 = vld [vmem:[#allocation4 + $0x3c] sm:$0xf]
    %v53 = vld [vmem:[#allocation4 + $0x40] sm:$0xf]
    %v54 = vld [vmem:[#allocation4 + $0x44] sm:$0xf]
    %v55 = vld [vmem:[#allocation4 + $0x48] sm:$0xf]
    %v56 = vld [vmem:[#allocation4 + $0x4c] sm:$0xf]
    %v57 = vld [vmem:[#allocation4 + $0x50] sm:$0xf]
    %v58 = vld [vmem:[#allocation4 + $0x54] sm:$0xf]
    %v59 = vld [vmem:[#allocation4 + $0x58] sm:$0xf]
    %v60 = vld [vmem:[#allocation4 + $0x5c] sm:$0xf]
    %v61 = vld [vmem:[#allocation4 + $0x60] sm:$0xf]
    %v62 = vld [vmem:[#allocation4 + $0x64] sm:$0xf]
    %v63 = vld [vmem:[#allocation4 + $0x68] sm:$0xf]
    %v64 = vld [vmem:[#allocation4 + $0x6c] sm:$0xf]
    %v65 = vld [vmem:[#allocation4 + $0x70] sm:$0xf]
    %v66 = vld [vmem:[#allocation4 + $0x74] sm:$0xf]
    %v67 = vld [vmem:[#allocation4 + $0x78] sm:$0xf]
    %v68 = vld [vmem:[#allocation4 + $0x7c] sm:$0xf]
    %v69 = vld [vmem:[#allocation4 + $0x80] sm:$0xf]
    %v70 = vld [vmem:[#allocation4 + $0x84] sm:$0xf]
    %v71 = vld [vmem:[#allocation4 + $0x88] sm:$0xf]
    %v72 = vld [vmem:[#allocation4 + $0x8c] sm:$0xf]
    %v73 = vld [vmem:[#allocation4 + $0x90] sm:$0xf]
    %v74 = vld [vmem:[#allocation4 + $0x94] sm:$0xf]
    %v75 = vld [vmem:[#allocation4 + $0x98] sm:$0xf]
    %v76 = vld [vmem:[#allocation4 + $0x9c] sm:$0xf]
    %v77 = vld [vmem:[#allocation4 + $0xa0] sm:$0xf]
    %v78 = vld [vmem:[#allocation4 + $0xa4] sm:$0xf]
    %v79 = vld [vmem:[#allocation4 + $0xa8] sm:$0xf]
    %v80 = vld [vmem:[#allocation4 + $0xac] sm:$0xf]
    %v81 = vld [vmem:[#allocation4 + $0xb0] sm:$0xf]
    %v82 = vld [vmem:[#allocation4 + $0xb4] sm:$0xf]
    %v83 = vld [vmem:[#allocation4 + $0xb8] sm:$0xf]
    %v84 = vld [vmem:[#allocation4 + $0xbc] sm:$0xf]
    %v85 = vld [vmem:[#allocation4 + $0xc0] sm:$0xf]
    %v86 = vld [vmem:[#allocation4 + $0xc4] sm:$0xf]
    %v87 = vld [vmem:[#allocation4 + $0xc8] sm:$0xf]
    %v88 = vld [vmem:[#allocation4 + $0xcc] sm:$0xf]
    %v89 = vld [vmem:[#allocation4 + $0xd0] sm:$0xf]
    %v90 = vld [vmem:[#allocation4 + $0xd4] sm:$0xf]
    %v91 = vld [vmem:[#allocation4 + $0xd8] sm:$0xf]
    %v92 = vld [vmem:[#allocation4 + $0xdc] sm:$0xf]
    %v93 = vld [vmem:[#allocation4 + $0xe0] sm:$0xf]
    %v94 = vld [vmem:[#allocation4 + $0xe4] sm:$0xf]
    %v95 = vld [vmem:[#allocation4 + $0xe8] sm:$0xf]
    %v96 = vld [vmem:[#allocation4 + $0xec] sm:$0xf]
    %v97 = vld [vmem:[#allocation4 + $0xf0] sm:$0xf]
    %v98 = vld [vmem:[#allocation4 + $0xf4] sm:$0xf]
    %v99 = vld [vmem:[#allocation4 + $0xf8] sm:$0xf]
    %v100 = vld [vmem:[#allocation4 + $0xfc] sm:$0xf]
    %v101 = vld [vmem:[#allocation4 + $0x100] sm:$0xf]
    %v102 = vld [vmem:[#allocation4 + $0x104] sm:$0xf]
    %v103 = vld [vmem:[#allocation4 + $0x108] sm:$0xf]
    %v104 = vld [vmem:[#allocation4 + $0x10c] sm:$0xf]
    %v105 = vld [vmem:[#allocation4 + $0x110] sm:$0xf]
    %v106 = vld [vmem:[#allocation4 + $0x114] sm:$0xf]
    %v107 = vld [vmem:[#allocation4 + $0x118] sm:$0xf]
    %v108 = vld [vmem:[#allocation4 + $0x11c] sm:$0xf]
    %v109 = vld [vmem:[#allocation4 + $0x120] sm:$0xf]
    %v110 = vld [vmem:[#allocation4 + $0x124] sm:$0xf]
    %v111 = vld [vmem:[#allocation4 + $0x128] sm:$0xf]
    %v112 = vld [vmem:[#allocation4 + $0x12c] sm:$0xf]
    %v113 = vld [vmem:[#allocation4 + $0x130] sm:$0xf]
    %v114 = vld [vmem:[#allocation4 + $0x134] sm:$0xf]
    %v115 = vld [vmem:[#allocation4 + $0x138] sm:$0xf]
    %v116 = vld [vmem:[#allocation4 + $0x13c] sm:$0xf]
    %v117 = vld [vmem:[#allocation4 + $0x140] sm:$0xf]
    %v118 = vld [vmem:[#allocation4 + $0x144] sm:$0xf]
    %v119 = vld [vmem:[#allocation4 + $0x148] sm:$0xf]
    %v120 = vld [vmem:[#allocation4 + $0x14c] sm:$0xf]
    %v121 = vld [vmem:[#allocation4 + $0x150] sm:$0xf]
    %v122 = vld [vmem:[#allocation4 + $0x154] sm:$0xf]
    %v123 = vld [vmem:[#allocation4 + $0x158] sm:$0xf]
    %v124 = vld [vmem:[#allocation4 + $0x15c] sm:$0xf]
    %v125 = vld [vmem:[#allocation4 + $0x160] sm:$0xf]
    %v126 = vld [vmem:[#allocation4 + $0x164] sm:$0xf]
    %v127 = vld [vmem:[#allocation4 + $0x168] sm:$0xf]
    %v128 = vld [vmem:[#allocation4 + $0x16c] sm:$0xf]
    %v129 = vld [vmem:[#allocation4 + $0x170] sm:$0xf]
    %v130 = vld [vmem:[#allocation4 + $0x174] sm:$0xf]
    %v131 = vld [vmem:[#allocation4 + $0x178] sm:$0xf]
    %v132 = vld [vmem:[#allocation4 + $0x17c] sm:$0xf]
    %v133 = vld [vmem:[#allocation4 + $0x180] sm:$0xf]
    %v134 = vld [vmem:[#allocation4 + $0x184] sm:$0xf]
    %v135 = vld [vmem:[#allocation4 + $0x188] sm:$0xf]
    %v136 = vld [vmem:[#allocation4 + $0x18c] sm:$0xf]
    %v137 = vld [vmem:[#allocation4 + $0x190] sm:$0xf]
    %v138 = vld [vmem:[#allocation4 + $0x194] sm:$0xf]
    %v139 = vld [vmem:[#allocation4 + $0x198] sm:$0xf]
    %v140 = vld [vmem:[#allocation4 + $0x19c] sm:$0xf]
    %v141 = vld [vmem:[#allocation4 + $0x1a0] sm:$0xf]
    %v142 = vld [vmem:[#allocation4 + $0x1a4] sm:$0xf]
    %v143 = vld [vmem:[#allocation4 + $0x1a8] sm:$0xf]
    %v144 = vld [vmem:[#allocation4 + $0x1ac] sm:$0xf]
    %v145 = vld [vmem:[#allocation4 + $0x1b0] sm:$0xf]
    %v146 = vld [vmem:[#allocation4 + $0x1b4] sm:$0xf]
    %v147 = vld [vmem:[#allocation4 + $0x1b8] sm:$0xf]
    %v148 = vld [vmem:[#allocation4 + $0x1bc] sm:$0xf]
    %v149 = vld [vmem:[#allocation4 + $0x1c0] sm:$0xf]
    %v150 = vld [vmem:[#allocation4 + $0x1c4] sm:$0xf]
    %v151 = vld [vmem:[#allocation4 + $0x1c8] sm:$0xf]
    %v152 = vld [vmem:[#allocation4 + $0x1cc] sm:$0xf]
    %v153 = vld [vmem:[#allocation4 + $0x1d0] sm:$0xf]
    %v154 = vld [vmem:[#allocation4 + $0x1d4] sm:$0xf]
    %v155 = vld [vmem:[#allocation4 + $0x1d8] sm:$0xf]
    %v156 = vld [vmem:[#allocation4 + $0x1dc] sm:$0xf]
    %v157 = vld [vmem:[#allocation4 + $0x1e0] sm:$0xf]
    %v158 = vld [vmem:[#allocation4 + $0x1e4] sm:$0xf]
    %v159 = vld [vmem:[#allocation4 + $0x1e8] sm:$0xf]
    %v160 = vld [vmem:[#allocation4 + $0x1ec] sm:$0xf]
    %v161 = vld [vmem:[#allocation4 + $0x1f0] sm:$0xf]
    %v162 = vld [vmem:[#allocation4 + $0x1f4] sm:$0xf]
    %v163 = vld [vmem:[#allocation4 + $0x1f8] sm:$0xf]
    %v164 = vld [vmem:[#allocation4 + $0x1fc] sm:$0xf]
    %v165 = vld [vmem:[#allocation4 + $0x200] sm:$0xf]
    %v166 = vld [vmem:[#allocation4 + $0x204] sm:$0xf]
    %v167 = vld [vmem:[#allocation4 + $0x208] sm:$0xf]
    %v168 = vld [vmem:[#allocation4 + $0x20c] sm:$0xf]
    %v169 = vld [vmem:[#allocation4 + $0x210] sm:$0xf]
    %v170 = vld [vmem:[#allocation4 + $0x214] sm:$0xf]
    %v171 = vld [vmem:[#allocation4 + $0x218] sm:$0xf]
    %v172 = vld [vmem:[#allocation4 + $0x21c] sm:$0xf]
    %v173 = vld [vmem:[#allocation4 + $0x220] sm:$0xf]
    %v174 = vld [vmem:[#allocation4 + $0x224] sm:$0xf]
    %v175 = vld [vmem:[#allocation4 + $0x228] sm:$0xf]
    %v176 = vld [vmem:[#allocation4 + $0x22c] sm:$0xf]
    %v177 = vld [vmem:[#allocation4 + $0x230] sm:$0xf]
    %v178 = vld [vmem:[#allocation4 + $0x234] sm:$0xf]
    %v179 = vld [vmem:[#allocation4 + $0x238] sm:$0xf]
    %v180 = vld [vmem:[#allocation4 + $0x23c] sm:$0xf]
    %v181 = vld [vmem:[#allocation4 + $0x240] sm:$0xf]
    %v182 = vld [vmem:[#allocation4 + $0x244] sm:$0xf]
    %v183 = vld [vmem:[#allocation4 + $0x248] sm:$0xf]
    %v184 = vld [vmem:[#allocation4 + $0x24c] sm:$0xf]
    %v185 = vld [vmem:[#allocation4 + $0x250] sm:$0xf]
    %v186 = vld [vmem:[#allocation4 + $0x254] sm:$0xf]
    %v187 = vld [vmem:[#allocation4 + $0x258] sm:$0xf]
    %v188 = vld [vmem:[#allocation4 + $0x25c] sm:$0xf]
    %v189 = vld [vmem:[#allocation4 + $0x260] sm:$0xf]
    %v190 = vunpack.c.l.bf16 %v189
    %v191 = vlaneseq
    %v192 = vshrl.u32 %v191, 7
    %s193 = sld [smem:[#allocation3]]
    %v194 = vstv %s193
    %vm195 = vcmp.lt.s32.totalorder %v192, %v194
    %vm196 = vmand 1, %vm195
    %vm197 = vmand 0, %vm195
    %v198 = vsel %vm196, 1.0, 0.0
    %v199 = vsel %vm197, 1.0, 0.0
    %s200 = scvt.s32.f32 %s193
    %v201 = vstv %s200
    %v202 = vrcp.pop %v201
    %v203 = vmul.f32 %v201, %v202
    %v204 = vsub.f32 1.0, %v203
    %v205 = vmul.f32 %v202, %v204
    %v206 = vadd.f32 %v202, %v205
    %vm207 = vweird.f32 %v201
    %vm208 = vweird.f32 %v202
    %vm209 = vmor %vm207, %vm208
    %v210 = vsel %vm209, %v202, %v206
    %v211 = vand.u32 2147483647, %v201
    %vm212 = vcmp.eq.f32.partialorder %v211, 8.507059e+37
    %v213 = vand.u32 %v201, 2147483648
    %v214 = vor.u32 1.1754944e-38, %v213
    %v215 = vsel %vm212, %v214, %v210
    %s216 = vtos %v215
    %v217 = vstv %s216
    %s218 = sld [smem:[#allocation3 + $0x1]]
    %v219 = vstv %s218
    %vm220 = vcmp.lt.s32.totalorder %v192, %v219
    %vm221 = vmand 0, %vm220
    %vm222 = vmand 1, %vm220
    %v223 = vsel %vm221, 1.0, %v198
    %v224 = vsel %vm222, 1.0, %v199
    %s225 = scvt.s32.f32 %s218
    %v226 = vstv %s225
    %v227 = vrcp.pop %v226
    %v228 = vmul.f32 %v226, %v227
    %v229 = vsub.f32 1.0, %v228
    %v230 = vmul.f32 %v227, %v229
    %v231 = vadd.f32 %v227, %v230
    %vm232 = vweird.f32 %v226
    %vm233 = vweird.f32 %v227
    %vm234 = vmor %vm232, %vm233
    %v235 = vsel %vm234, %v227, %v231
    %v236 = vand.u32 2147483647, %v226
    %vm237 = vcmp.eq.f32.partialorder %v236, 8.507059e+37
    %v238 = vand.u32 %v226, 2147483648
    %v239 = vor.u32 1.1754944e-38, %v238
    %v240 = vsel %vm237, %v239, %v235
    %s241 = vtos %v240
    %v242 = vstv %s241
    %v243 = vld [vmem:[%s1] sm:$0xff]
    %v244 = vld [vmem:[%s1 + $0x8] sm:$0xff]
    %v245 = vpack.c.bf16 %v244, %v243
    %v246 = vperm.slane %v190, 0
    %v255 = vunpack.c.l.b16 %v37
    %v256 = vunpack.c.l.b16 %v38
    %v257 = vunpack.c.l.b16 %v39
    %v258 = vunpack.c.l.b16 %v40
    %v259 = vunpack.c.l.b16 %v41
    %v260 = vunpack.c.l.b16 %v42
    %v261 = vunpack.c.l.b16 %v43
    %v262 = vunpack.c.l.b16 %v44
    %v263 = vpack.c.b16 %v256, %v255
    %v264 = vpack.c.b16 %v258, %v257
    %v265 = vpack.c.b16 %v260, %v259
    %v266 = vpack.c.b16 %v262, %v261
    %vm271 = vcmask 523264
    %v273 = vsel %vm271, %v245, 0
    %275 = vmatpush.bf16.msra.mxu0 0
    %276 = vmatpush.bf16.msra.mxu0 0
    %277 = vmatpush.bf16.msra.mxu0 0
    %278 = vmatpush.bf16.msra.mxu0 0
    %279 = vmatpush.bf16.msra.mxu0 %v266
    %280 = vmatpush.bf16.msra.mxu0 %v265
    %281 = vmatpush.bf16.msra.mxu0 %v264
    %282 = vmatpush.bf16.msra.mxu0 %v263
    %283 = vmatmul.bf16.gmra.mxu0 %v273
    %v284 = vpop.f32.mrf.mxu0
    %v285 = vadd.f32 %v246, %v284
    %v286 = vpop.f32.mrf.mxu0
    %v287 = vadd.f32 %v246, %v286
    %288 = vdwg.mxu0
    %v289 = vmul.f32 %v285, %v223
    %v290 = vmul.f32 %v287, %v224
    %v291 = vrot.slane %v289, 4
    %v292 = vadd.f32 %v289, %v291
    %v293 = vrot.slane %v292, 2
    %v294 = vadd.f32 %v292, %v293
    %v295 = vrot.slane %v294, 1
    %v296 = vadd.f32 %v294, %v295
    %v297 = vrot.slane %v290, 4
    %v298 = vadd.f32 %v290, %v297
    %v299 = vrot.slane %v298, 2
    %v300 = vadd.f32 %v298, %v299
    %v301 = vrot.slane %v300, 1
    %v302 = vadd.f32 %v300, %v301
    %v303 = vmul.f32 %v296, %v217
    %v304 = vmul.f32 %v302, %v242
    %v305 = vsub.f32 %v285, %v303
    %v306 = vsub.f32 %v287, %v304
    %v307 = vmul.f32 %v305, %v305
    %v308 = vmul.f32 %v306, %v306
    %v309 = vmul.f32 %v307, %v223
    %v310 = vmul.f32 %v308, %v224
    %v311 = vrot.slane %v309, 4
    %v312 = vadd.f32 %v309, %v311
    %v313 = vrot.slane %v312, 2
    %v314 = vadd.f32 %v312, %v313
    %v315 = vrot.slane %v314, 1
    %v316 = vadd.f32 %v314, %v315
    %v317 = vrot.slane %v310, 4
    %v318 = vadd.f32 %v310, %v317
    %v319 = vrot.slane %v318, 2
    %v320 = vadd.f32 %v318, %v319
    %v321 = vrot.slane %v320, 1
    %v322 = vadd.f32 %v320, %v321
    %v323 = vmul.f32 %v316, %v217
    %v324 = vmul.f32 %v322, %v242
    %v325 = vadd.f32 %v323, 1e-05
    %v326 = vadd.f32 %v324, 1e-05
    %v327 = vrsqrt.pop %v325
    %v328 = vmul.f32 %v327, %v325
    %v329 = vmul.f32 %v328, %v327
    %v330 = vmul.f32 0.5, %v329
    %v331 = vsub.f32 1.5, %v330
    %v332 = vmul.f32 %v327, %v331
    %vm333 = vweird.f32 %v325
    %vm334 = vweird.f32 %v327
    %vm335 = vmor %vm333, %vm334
    %v336 = vsel %vm335, %v327, %v332
    %v337 = vrsqrt.pop %v326
    %v338 = vmul.f32 %v337, %v326
    %v339 = vmul.f32 %v338, %v337
    %v340 = vmul.f32 0.5, %v339
    %v341 = vsub.f32 1.5, %v340
    %v342 = vmul.f32 %v337, %v341
    %vm343 = vweird.f32 %v326
    %vm344 = vweird.f32 %v337
    %vm345 = vmor %vm343, %vm344
    %v346 = vsel %vm345, %v337, %v342
    %v347 = vmul.f32 %v305, %v336
    %v348 = vmul.f32 %v306, %v346
    %v349 = vmul.f32 %v347, %v223
    %v350 = vmul.f32 %v348, %v224
    %v353 = vrot.slane %v349, 7
    %v354 = vrot.slane %v350, 7
    %vm357 = vcmask 1040384
    %v358 = vsel %vm357, 0.0, %v353
    %v359 = vsel %vm357, 0.0, %v354
    %v360 = vrot.slane %v349, 1
    %v361 = vrot.slane %v350, 1
    %vm364 = vcmask 1046528
    %v365 = vsel %vm364, %v360, 0.0
    %v366 = vsel %vm364, %v361, 0.0
    %v367 = vpack.c.bf16 %v359, %v358
    %v368 = vpack.c.bf16 %v350, %v349
    %v369 = vpack.c.bf16 %v366, %v365
    %v370 = vperm.slane %v190, 1
    %v419 = vunpack.c.l.b16 %v45
    %v420 = vunpack.c.l.b16 %v46
    %v421 = vunpack.c.l.b16 %v47
    %v422 = vunpack.c.l.b16 %v48
    %v423 = vunpack.c.l.b16 %v49
    %v424 = vunpack.c.l.b16 %v50
    %v425 = vunpack.c.l.b16 %v51
    %v426 = vunpack.c.l.b16 %v52
    %v427 = vunpack.c.l.b16 %v53
    %v428 = vunpack.c.l.b16 %v54
    %v429 = vunpack.c.l.b16 %v55
    %v430 = vunpack.c.l.b16 %v56
    %v431 = vunpack.c.l.b16 %v57
    %v432 = vunpack.c.l.b16 %v58
    %v433 = vunpack.c.l.b16 %v59
    %v434 = vunpack.c.l.b16 %v60
    %v435 = vunpack.c.l.b16 %v61
    %v436 = vunpack.c.l.b16 %v62
    %v437 = vunpack.c.l.b16 %v63
    %v438 = vunpack.c.l.b16 %v64
    %v439 = vunpack.c.l.b16 %v65
    %v440 = vunpack.c.l.b16 %v66
    %v441 = vunpack.c.l.b16 %v67
    %v442 = vunpack.c.l.b16 %v68
    %v443 = vunpack.c.l.b16 %v69
    %v444 = vunpack.c.l.b16 %v70
    %v445 = vunpack.c.l.b16 %v71
    %v446 = vunpack.c.l.b16 %v72
    %v447 = vunpack.c.l.b16 %v73
    %v448 = vunpack.c.l.b16 %v74
    %v449 = vunpack.c.l.b16 %v75
    %v450 = vunpack.c.l.b16 %v76
    %v451 = vunpack.c.l.b16 %v77
    %v452 = vunpack.c.l.b16 %v78
    %v453 = vunpack.c.l.b16 %v79
    %v454 = vunpack.c.l.b16 %v80
    %v455 = vunpack.c.l.b16 %v81
    %v456 = vunpack.c.l.b16 %v82
    %v457 = vunpack.c.l.b16 %v83
    %v458 = vunpack.c.l.b16 %v84
    %v459 = vunpack.c.l.b16 %v85
    %v460 = vunpack.c.l.b16 %v86
    %v461 = vunpack.c.l.b16 %v87
    %v462 = vunpack.c.l.b16 %v88
    %v463 = vunpack.c.l.b16 %v89
    %v464 = vunpack.c.l.b16 %v90
    %v465 = vunpack.c.l.b16 %v91
    %v466 = vunpack.c.l.b16 %v92
    %v467 = vpack.c.b16 %v420, %v419
    %v468 = vpack.c.b16 %v422, %v421
    %v469 = vpack.c.b16 %v424, %v423
    %v470 = vpack.c.b16 %v426, %v425
    %v471 = vpack.c.b16 %v428, %v427
    %v472 = vpack.c.b16 %v430, %v429
    %v473 = vpack.c.b16 %v432, %v431
    %v474 = vpack.c.b16 %v434, %v433
    %v475 = vpack.c.b16 %v436, %v435
    %v476 = vpack.c.b16 %v438, %v437
    %v477 = vpack.c.b16 %v440, %v439
    %v478 = vpack.c.b16 %v442, %v441
    %v479 = vpack.c.b16 %v444, %v443
    %v480 = vpack.c.b16 %v446, %v445
    %v481 = vpack.c.b16 %v448, %v447
    %v482 = vpack.c.b16 %v450, %v449
    %v483 = vpack.c.b16 %v452, %v451
    %v484 = vpack.c.b16 %v454, %v453
    %v485 = vpack.c.b16 %v456, %v455
    %v486 = vpack.c.b16 %v458, %v457
    %v487 = vpack.c.b16 %v460, %v459
    %v488 = vpack.c.b16 %v462, %v461
    %v489 = vpack.c.b16 %v464, %v463
    %v490 = vpack.c.b16 %v466, %v465
    %515 = vmatpush.bf16.msra.mxu0 %v474
    %516 = vmatpush.bf16.msra.mxu0 %v473
    %517 = vmatpush.bf16.msra.mxu0 %v472
    %518 = vmatpush.bf16.msra.mxu0 %v471
    %519 = vmatpush.bf16.msra.mxu0 %v470
    %520 = vmatpush.bf16.msra.mxu0 %v469
    %521 = vmatpush.bf16.msra.mxu0 %v468
    %522 = vmatpush.bf16.msra.mxu0 %v467
    %523 = vmatmul.bf16.gmra.mxu0 %v367
    %v524 = vpop.f32.mrf.mxu0
    %v525 = vadd.f32 %v370, %v524
    %v526 = vpop.f32.mrf.mxu0
    %v527 = vadd.f32 %v370, %v526
    %528 = vdwg.mxu0
    %529 = vmatpush.bf16.msra.mxu0 %v482
    %530 = vmatpush.bf16.msra.mxu0 %v481
    %531 = vmatpush.bf16.msra.mxu0 %v480
    %532 = vmatpush.bf16.msra.mxu0 %v479
    %533 = vmatpush.bf16.msra.mxu0 %v478
    %534 = vmatpush.bf16.msra.mxu0 %v477
    %535 = vmatpush.bf16.msra.mxu0 %v476
    %536 = vmatpush.bf16.msra.mxu0 %v475
    %537 = vmatmul.bf16.gmra.mxu0 %v368
    %v538 = vpop.f32.mrf.mxu0
    %v539 = vadd.f32 %v525, %v538
    %v540 = vpop.f32.mrf.mxu0
    %v541 = vadd.f32 %v527, %v540
    %542 = vdwg.mxu0
    %543 = vmatpush.bf16.msra.mxu0 %v490
    %544 = vmatpush.bf16.msra.mxu0 %v489
    %545 = vmatpush.bf16.msra.mxu0 %v488
    %546 = vmatpush.bf16.msra.mxu0 %v487
    %547 = vmatpush.bf16.msra.mxu0 %v486
    %548 = vmatpush.bf16.msra.mxu0 %v485
    %549 = vmatpush.bf16.msra.mxu0 %v484
    %550 = vmatpush.bf16.msra.mxu0 %v483
    %551 = vmatmul.bf16.gmra.mxu0 %v369
    %v552 = vpop.f32.mrf.mxu0
    %v553 = vadd.f32 %v539, %v552
    %v554 = vpop.f32.mrf.mxu0
    %v555 = vadd.f32 %v541, %v554
    %556 = vdwg.mxu0
    %v557 = vmax.f32 %v553, 0.0
    %v558 = vmax.f32 %v555, 0.0
    %v561 = vrot.slane %v557, 7
    %v562 = vrot.slane %v558, 7
    %v565 = vsel %vm357, 0.0, %v561
    %v566 = vsel %vm357, 0.0, %v562
    %v567 = vrot.slane %v557, 1
    %v568 = vrot.slane %v558, 1
    %v571 = vsel %vm364, %v567, 0.0
    %v572 = vsel %vm364, %v568, 0.0
    %v573 = vpack.c.bf16 %v566, %v565
    %v574 = vpack.c.bf16 %v558, %v557
    %v575 = vpack.c.bf16 %v572, %v571
    %v576 = vperm.slane %v190, 2
    %v625 = vunpack.c.l.b16 %v93
    %v626 = vunpack.c.l.b16 %v94
    %v627 = vunpack.c.l.b16 %v95
    %v628 = vunpack.c.l.b16 %v96
    %v629 = vunpack.c.l.b16 %v97
    %v630 = vunpack.c.l.b16 %v98
    %v631 = vunpack.c.l.b16 %v99
    %v632 = vunpack.c.l.b16 %v100
    %v633 = vunpack.c.l.b16 %v101
    %v634 = vunpack.c.l.b16 %v102
    %v635 = vunpack.c.l.b16 %v103
    %v636 = vunpack.c.l.b16 %v104
    %v637 = vunpack.c.l.b16 %v105
    %v638 = vunpack.c.l.b16 %v106
    %v639 = vunpack.c.l.b16 %v107
    %v640 = vunpack.c.l.b16 %v108
    %v641 = vunpack.c.l.b16 %v109
    %v642 = vunpack.c.l.b16 %v110
    %v643 = vunpack.c.l.b16 %v111
    %v644 = vunpack.c.l.b16 %v112
    %v645 = vunpack.c.l.b16 %v113
    %v646 = vunpack.c.l.b16 %v114
    %v647 = vunpack.c.l.b16 %v115
    %v648 = vunpack.c.l.b16 %v116
    %v649 = vunpack.c.l.b16 %v117
    %v650 = vunpack.c.l.b16 %v118
    %v651 = vunpack.c.l.b16 %v119
    %v652 = vunpack.c.l.b16 %v120
    %v653 = vunpack.c.l.b16 %v121
    %v654 = vunpack.c.l.b16 %v122
    %v655 = vunpack.c.l.b16 %v123
    %v656 = vunpack.c.l.b16 %v124
    %v657 = vunpack.c.l.b16 %v125
    %v658 = vunpack.c.l.b16 %v126
    %v659 = vunpack.c.l.b16 %v127
    %v660 = vunpack.c.l.b16 %v128
    %v661 = vunpack.c.l.b16 %v129
    %v662 = vunpack.c.l.b16 %v130
    %v663 = vunpack.c.l.b16 %v131
    %v664 = vunpack.c.l.b16 %v132
    %v665 = vunpack.c.l.b16 %v133
    %v666 = vunpack.c.l.b16 %v134
    %v667 = vunpack.c.l.b16 %v135
    %v668 = vunpack.c.l.b16 %v136
    %v669 = vunpack.c.l.b16 %v137
    %v670 = vunpack.c.l.b16 %v138
    %v671 = vunpack.c.l.b16 %v139
    %v672 = vunpack.c.l.b16 %v140
    %v673 = vpack.c.b16 %v626, %v625
    %v674 = vpack.c.b16 %v628, %v627
    %v675 = vpack.c.b16 %v630, %v629
    %v676 = vpack.c.b16 %v632, %v631
    %v677 = vpack.c.b16 %v634, %v633
    %v678 = vpack.c.b16 %v636, %v635
    %v679 = vpack.c.b16 %v638, %v637
    %v680 = vpack.c.b16 %v640, %v639
    %v681 = vpack.c.b16 %v642, %v641
    %v682 = vpack.c.b16 %v644, %v643
    %v683 = vpack.c.b16 %v646, %v645
    %v684 = vpack.c.b16 %v648, %v647
    %v685 = vpack.c.b16 %v650, %v649
    %v686 = vpack.c.b16 %v652, %v651
    %v687 = vpack.c.b16 %v654, %v653
    %v688 = vpack.c.b16 %v656, %v655
    %v689 = vpack.c.b16 %v658, %v657
    %v690 = vpack.c.b16 %v660, %v659
    %v691 = vpack.c.b16 %v662, %v661
    %v692 = vpack.c.b16 %v664, %v663
    %v693 = vpack.c.b16 %v666, %v665
    %v694 = vpack.c.b16 %v668, %v667
    %v695 = vpack.c.b16 %v670, %v669
    %v696 = vpack.c.b16 %v672, %v671
    %721 = vmatpush.bf16.msra.mxu0 %v680
    %722 = vmatpush.bf16.msra.mxu0 %v679
    %723 = vmatpush.bf16.msra.mxu0 %v678
    %724 = vmatpush.bf16.msra.mxu0 %v677
    %725 = vmatpush.bf16.msra.mxu0 %v676
    %726 = vmatpush.bf16.msra.mxu0 %v675
    %727 = vmatpush.bf16.msra.mxu0 %v674
    %728 = vmatpush.bf16.msra.mxu0 %v673
    %729 = vmatmul.bf16.gmra.mxu0 %v573
    %v730 = vpop.f32.mrf.mxu0
    %v731 = vadd.f32 %v576, %v730
    %v732 = vpop.f32.mrf.mxu0
    %v733 = vadd.f32 %v576, %v732
    %734 = vdwg.mxu0
    %735 = vmatpush.bf16.msra.mxu0 %v688
    %736 = vmatpush.bf16.msra.mxu0 %v687
    %737 = vmatpush.bf16.msra.mxu0 %v686
    %738 = vmatpush.bf16.msra.mxu0 %v685
    %739 = vmatpush.bf16.msra.mxu0 %v684
    %740 = vmatpush.bf16.msra.mxu0 %v683
    %741 = vmatpush.bf16.msra.mxu0 %v682
    %742 = vmatpush.bf16.msra.mxu0 %v681
    %743 = vmatmul.bf16.gmra.mxu0 %v574
    %v744 = vpop.f32.mrf.mxu0
    %v745 = vadd.f32 %v731, %v744
    %v746 = vpop.f32.mrf.mxu0
    %v747 = vadd.f32 %v733, %v746
    %748 = vdwg.mxu0
    %749 = vmatpush.bf16.msra.mxu0 %v696
    %750 = vmatpush.bf16.msra.mxu0 %v695
    %751 = vmatpush.bf16.msra.mxu0 %v694
    %752 = vmatpush.bf16.msra.mxu0 %v693
    %753 = vmatpush.bf16.msra.mxu0 %v692
    %754 = vmatpush.bf16.msra.mxu0 %v691
    %755 = vmatpush.bf16.msra.mxu0 %v690
    %756 = vmatpush.bf16.msra.mxu0 %v689
    %757 = vmatmul.bf16.gmra.mxu0 %v575
    %v758 = vpop.f32.mrf.mxu0
    %v759 = vadd.f32 %v745, %v758
    %v760 = vpop.f32.mrf.mxu0
    %v761 = vadd.f32 %v747, %v760
    %762 = vdwg.mxu0
    %v763 = vmax.f32 %v759, 0.0
    %v764 = vmax.f32 %v761, 0.0
    %v765 = vmul.f32 %v763, %v223
    %v766 = vmul.f32 %v764, %v224
    %v767 = vrot.slane %v765, 4
    %v768 = vadd.f32 %v765, %v767
    %v769 = vrot.slane %v768, 2
    %v770 = vadd.f32 %v768, %v769
    %v771 = vrot.slane %v770, 1
    %v772 = vadd.f32 %v770, %v771
    %v773 = vrot.slane %v766, 4
    %v774 = vadd.f32 %v766, %v773
    %v775 = vrot.slane %v774, 2
    %v776 = vadd.f32 %v774, %v775
    %v777 = vrot.slane %v776, 1
    %v778 = vadd.f32 %v776, %v777
    %v779 = vmul.f32 %v772, %v217
    %v780 = vmul.f32 %v778, %v242
    %v781 = vsub.f32 %v763, %v779
    %v782 = vsub.f32 %v764, %v780
    %v783 = vmul.f32 %v781, %v223
    %v784 = vmul.f32 %v782, %v224
    %v785 = vmul.f32 %v783, %v783
    %v786 = vmul.f32 %v784, %v784
    %v787 = vmul.f32 %v785, %v223
    %v788 = vmul.f32 %v786, %v224
    %v789 = vrot.slane %v787, 4
    %v790 = vadd.f32 %v787, %v789
    %v791 = vrot.slane %v790, 2
    %v792 = vadd.f32 %v790, %v791
    %v793 = vrot.slane %v792, 1
    %v794 = vadd.f32 %v792, %v793
    %v795 = vrot.slane %v788, 4
    %v796 = vadd.f32 %v788, %v795
    %v797 = vrot.slane %v796, 2
    %v798 = vadd.f32 %v796, %v797
    %v799 = vrot.slane %v798, 1
    %v800 = vadd.f32 %v798, %v799
    %v801 = vmul.f32 %v794, %v217
    %v802 = vmul.f32 %v800, %v242
    %v803 = vadd.f32 %v801, 1e-05
    %v804 = vadd.f32 %v802, 1e-05
    %v805 = vrsqrt.pop %v803
    %v806 = vmul.f32 %v805, %v803
    %v807 = vmul.f32 %v806, %v805
    %v808 = vmul.f32 0.5, %v807
    %v809 = vsub.f32 1.5, %v808
    %v810 = vmul.f32 %v805, %v809
    %v811 = vmul.f32 %v803, %v810
    %vm812 = vcmp.eq.f32.partialorder %v803, inf
    %v813 = vsel %vm812, %v803, %v811
    %vm814 = vcmp.eq.f32.partialorder %v803, 0.0
    %v815 = vand.u32 %v803, 2147483648
    %v816 = vsel %vm814, %v815, %v813
    %v817 = vrsqrt.pop %v804
    %v818 = vmul.f32 %v817, %v804
    %v819 = vmul.f32 %v818, %v817
    %v820 = vmul.f32 0.5, %v819
    %v821 = vsub.f32 1.5, %v820
    %v822 = vmul.f32 %v817, %v821
    %v823 = vmul.f32 %v804, %v822
    %vm824 = vcmp.eq.f32.partialorder %v804, inf
    %v825 = vsel %vm824, %v804, %v823
    %vm826 = vcmp.eq.f32.partialorder %v804, 0.0
    %v827 = vand.u32 %v804, 2147483648
    %v828 = vsel %vm826, %v827, %v825
    %v829 = vpack.c.bf16 %v779, %v779
    %v830 = vpack.c.bf16 %v816, %v816
    %v831 = vpack.c.bf16 %v780, %v780
    %v832 = vpack.c.bf16 %v828, %v828
    %v833 = vperm.slane %v190, 3
    %v838 = vunpack.c.l.b16 %v829
    %v839 = vunpack.c.l.b16 %v830
    %v840 = vunpack.c.l.b16 %v831
    %v841 = vunpack.c.l.b16 %v832
    %v842 = vrot.slane %v840, 7
    %vm843 = vcmask 1041409
    %v844 = vsel %vm843, %v842, %v838
    %v845 = vrot.slane %v841, 7
    %v846 = vsel %vm843, %v845, %v839
    %v847 = vpack.c.b16 %v844, %v844
    %v848 = vpack.c.b16 %v846, %v846
    %v883 = vunpack.c.l.b16 %v141
    %v884 = vunpack.c.l.b16 %v142
    %v885 = vunpack.c.l.b16 %v143
    %v886 = vunpack.c.l.b16 %v144
    %v887 = vunpack.c.l.b16 %v145
    %v888 = vunpack.c.l.b16 %v146
    %v889 = vunpack.c.l.b16 %v147
    %v890 = vunpack.c.l.b16 %v148
    %v891 = vunpack.c.l.b16 %v149
    %v892 = vunpack.c.l.b16 %v150
    %v893 = vunpack.c.l.b16 %v151
    %v894 = vunpack.c.l.b16 %v152
    %v895 = vunpack.c.l.b16 %v153
    %v896 = vunpack.c.l.b16 %v154
    %v897 = vunpack.c.l.b16 %v155
    %v898 = vunpack.c.l.b16 %v156
    %v899 = vunpack.c.l.b16 %v157
    %v900 = vunpack.c.l.b16 %v158
    %v901 = vunpack.c.l.b16 %v159
    %v902 = vunpack.c.l.b16 %v160
    %v903 = vunpack.c.l.b16 %v161
    %v904 = vunpack.c.l.b16 %v162
    %v905 = vunpack.c.l.b16 %v163
    %v906 = vunpack.c.l.b16 %v164
    %v907 = vunpack.c.l.b16 %v165
    %v908 = vunpack.c.l.b16 %v166
    %v909 = vunpack.c.l.b16 %v167
    %v910 = vunpack.c.l.b16 %v168
    %v911 = vunpack.c.l.b16 %v169
    %v912 = vunpack.c.l.b16 %v170
    %v913 = vunpack.c.l.b16 %v171
    %v914 = vunpack.c.l.b16 %v172
    %v915 = vpack.c.b16 %v884, %v883
    %v916 = vpack.c.b16 %v886, %v885
    %v917 = vpack.c.b16 %v888, %v887
    %v918 = vpack.c.b16 %v890, %v889
    %v919 = vpack.c.b16 %v892, %v891
    %v920 = vpack.c.b16 %v894, %v893
    %v921 = vpack.c.b16 %v896, %v895
    %v922 = vpack.c.b16 %v898, %v897
    %v923 = vpack.c.b16 %v900, %v899
    %v924 = vpack.c.b16 %v902, %v901
    %v925 = vpack.c.b16 %v904, %v903
    %v926 = vpack.c.b16 %v906, %v905
    %v927 = vpack.c.b16 %v908, %v907
    %v928 = vpack.c.b16 %v910, %v909
    %v929 = vpack.c.b16 %v912, %v911
    %v930 = vpack.c.b16 %v914, %v913
    %947 = vmatpush.bf16.msra.mxu0 %v922
    %948 = vmatpush.bf16.msra.mxu0 %v921
    %949 = vmatpush.bf16.msra.mxu0 %v920
    %950 = vmatpush.bf16.msra.mxu0 %v919
    %951 = vmatpush.bf16.msra.mxu0 %v918
    %952 = vmatpush.bf16.msra.mxu0 %v917
    %953 = vmatpush.bf16.msra.mxu0 %v916
    %954 = vmatpush.bf16.msra.mxu0 %v915
    %955 = vmatmul.bf16.gmra.mxu0 %v847
    %v956 = vpop.f32.mrf.mxu0
    %v957 = vadd.f32 %v833, %v956
    %v958 = vpop.f32.mrf.mxu0
    %959 = vdwg.mxu0
    %960 = vmatpush.bf16.msra.mxu0 %v930
    %961 = vmatpush.bf16.msra.mxu0 %v929
    %962 = vmatpush.bf16.msra.mxu0 %v928
    %963 = vmatpush.bf16.msra.mxu0 %v927
    %964 = vmatpush.bf16.msra.mxu0 %v926
    %965 = vmatpush.bf16.msra.mxu0 %v925
    %966 = vmatpush.bf16.msra.mxu0 %v924
    %967 = vmatpush.bf16.msra.mxu0 %v923
    %968 = vmatmul.bf16.gmra.mxu0 %v848
    %v969 = vpop.f32.mrf.mxu0
    %v970 = vadd.f32 %v957, %v969
    %v971 = vpop.f32.mrf.mxu0
    %972 = vdwg.mxu0
    %v973 = vpack.c.bf16 %v970, %v970
    %v974 = vperm.slane %v190, 4
    %v991 = vunpack.c.l.b16 %v173
    %v992 = vunpack.c.l.b16 %v174
    %v993 = vunpack.c.l.b16 %v175
    %v994 = vunpack.c.l.b16 %v176
    %v995 = vunpack.c.l.b16 %v177
    %v996 = vunpack.c.l.b16 %v178
    %v997 = vunpack.c.l.b16 %v179
    %v998 = vunpack.c.l.b16 %v180
    %v999 = vunpack.c.l.b16 %v181
    %v1000 = vunpack.c.l.b16 %v182
    %v1001 = vunpack.c.l.b16 %v183
    %v1002 = vunpack.c.l.b16 %v184
    %v1003 = vunpack.c.l.b16 %v185
    %v1004 = vunpack.c.l.b16 %v186
    %v1005 = vunpack.c.l.b16 %v187
    %v1006 = vunpack.c.l.b16 %v188
    %v1007 = vpack.c.b16 %v992, %v991
    %v1008 = vpack.c.b16 %v994, %v993
    %v1009 = vpack.c.b16 %v996, %v995
    %v1010 = vpack.c.b16 %v998, %v997
    %v1011 = vpack.c.b16 %v1000, %v999
    %v1012 = vpack.c.b16 %v1002, %v1001
    %v1013 = vpack.c.b16 %v1004, %v1003
    %v1014 = vpack.c.b16 %v1006, %v1005
    %1023 = vmatpush.bf16.msra.mxu0 %v1014
    %1024 = vmatpush.bf16.msra.mxu0 %v1013
    %1025 = vmatpush.bf16.msra.mxu0 %v1012
    %1026 = vmatpush.bf16.msra.mxu0 %v1011
    %1027 = vmatpush.bf16.msra.mxu0 %v1010
    %1028 = vmatpush.bf16.msra.mxu0 %v1009
    %1029 = vmatpush.bf16.msra.mxu0 %v1008
    %1030 = vmatpush.bf16.msra.mxu0 %v1007
    %1031 = vmatmul.bf16.gmra.mxu0 %v973
    %v1032 = vpop.f32.mrf.mxu0
    %v1033 = vadd.f32 %v974, %v1032
    %v1034 = vpop.f32.mrf.mxu0
    %1035 = vdwg.mxu0
    %v1036 = vlaneseq
    %v1037 = vand.u32 %v1036, 127
    %vm1038 = vcmp.lt.s32.totalorder %v1037, 8
    %v1039 = vsel %vm1038, %v1033, -1e+30
    %vm1040 = vcmask 1041408
    %v1041 = vsel %vm1040, %v1039, -inf
    %1042 = vmax.xlane.f32.xlu0 %v1041
    %v1043 = vpop.xlane.xlu0 %1042
    %v1044 = vsub.f32 %v1039, %v1043
    %v1045 = vmul.f32 %v1044, 1.442695
    %v1046 = vpow.pop %v1045
    %v1047 = vsel %vm1040, %v1046, 0.0
    %1048 = vadd.xlane.f32.xlu0 %v1047
    %v1049 = vpop.xlane.xlu0 %1048
    %v1050 = vlog2.pop %v1049
    %v1051 = vmul.f32 %v1050, 0.6931472
    %v1052 = vsub.f32 %v1044, %v1051
    %v1053 = vsel %vm1040, %v1052, 0.0
    %1054 = vst [vmem:[%s3] sm:$0xff] %v1053
    // Predicated region
    $region14: #{audify_forward.1} parent=1 // pred_check
      _
    $region15: #{audify_forward.1} parent=1 // pred_check_branch
      %1056 = sbr.rel (0) target = $region17
    $region16: #{audify_forward.1} parent=1 // pred_region
      _
    $region17: #{audify_forward.1} parent=1 // pred_fallthru
      _
    // Predicated region
    $region18: #{audify_forward.1} parent=1 // pred_check
      _
    $region19: #{audify_forward.1} parent=1 // pred_check_branch
      %1058 = sbr.rel (0) target = $region21
    $region20: #{audify_forward.1} parent=1 // pred_region
      _
    $region21: #{audify_forward.1} parent=1 // pred_fallthru
      _
    %1059 = vsyncpa [#allocation5], 1

</llo_original>
